<compile_context>
chip_gen: v7x
topology: tpu7x:2x2x1
jax: 0.10.0
libtpu: 0.0.40
codegen_flags: <defaults>
</compile_context>

<pallas_src>
import jax
import jax.numpy as jnp
from jax import lax
from jax.experimental import pallas as pl
from jax.experimental.pallas import tpu as pltpu


def _dice_partial_kernel(pred_ref, tgt_ref, inter_ref, ssm_ref, soh_ref):
    """pred_ref: (N, C, Pt) native dtype, tgt_ref: (N, 1, Pt) int (1..C, pad 0),
    outputs: three (1, N, C) f32 partial-sum accumulators for this chunk."""
    k = pl.program_id(1)

    @pl.when(k == 0)
    def _init():
        inter_ref[...] = jnp.zeros_like(inter_ref)
        ssm_ref[...] = jnp.zeros_like(ssm_ref)
        soh_ref[...] = jnp.zeros_like(soh_ref)

    p = pred_ref[...].astype(jnp.float32)                 # (N, C, Pt) f32
    N, C, Pt = p.shape

    # softmax over the class axis (dim=1 of NCHW)
    m = jnp.max(p, axis=1, keepdims=True)                 # (N, 1, Pt)
    e = jnp.exp(p - m)
    denom = jnp.sum(e, axis=1, keepdims=True)             # (N, 1, Pt), in [1, C]
    r = pl.reciprocal(denom, approx=True)                 # EUP vrcp (free slot)
    r = r * (2.0 - denom * r)                             # one Newton refinement
    sm = e * r                                            # (N, C, Pt)

    # one_hot(target - 1) as an f32 match mask, computed once and reused.
    # TODO(synk): PyTorch's runtime assert on the target index range has no
    # in-kernel equivalent; out-of-range targets give an all-zero one-hot row.
    tgt = tgt_ref[...].astype(jnp.int32) - 1              # (N, 1, Pt); pads -> -1
    cls = lax.broadcasted_iota(jnp.int32, (1, C, 1), 1)   # broadcastable classes
    matchf = (cls == tgt).astype(jnp.float32)             # (N, C, Pt)

    inter_ref[0, :, :] = inter_ref[0, :, :] + jnp.sum(matchf * sm, axis=2)
    ssm_ref[0, :, :] = ssm_ref[0, :, :] + jnp.sum(sm, axis=2)
    soh_ref[0, :, :] = soh_ref[0, :, :] + jnp.sum(matchf, axis=2)


def _tpu_kind() -> str:
    try:
        return jax.devices()[0].device_kind.lower()
    except Exception:
        return ""


def _choose_tile_pixels(N, C, P, pred_itemsize, tgt_itemsize, budget_bytes):
    """Pixel-tile width (lanes): largest multiple of 128 under the VMEM budget."""
    c_pad = ((C + 7) // 8) * 8            # sublane padding of the class axis
    # per pixel column: double-buffered pred tile + double-buffered target tile
    # (padded to 8 sublanes) + ~7 f32 full-tile temporaries in the kernel body
    bytes_per_pixel = N * (c_pad * (2 * pred_itemsize + 7 * 4)
                           + 2 * 8 * tgt_itemsize)
    pt = max(128, (budget_bytes // max(bytes_per_pixel, 1)) // 128 * 128)
    pt = min(pt, 16384)
    p_ceil = ((P + 127) // 128) * 128     # never tile wider than (padded) P
    return min(pt, p_ceil)


def dice_loss(pred, target, smooth: float = 1.0):
    """pred: (N, C, H, W) float (any float dtype), target: (N, H, W) int in [1, C]."""
    N, C, H, W = pred.shape
    P = H * W
    pred_flat = pred.reshape(N, C, P)                     # native dtype in HBM
    tgt_flat = target.reshape(N, 1, P)
    if not jnp.issubdtype(tgt_flat.dtype, jnp.integer):
        tgt_flat = tgt_flat.astype(jnp.int32)

    kind = _tpu_kind()
    if "v7" in kind:
        # 64 MiB physical VMEM, shared with double-buffered inputs: stay small.
        budget, vmem_limit = 20 * 1024 * 1024, 32 * 1024 * 1024
    else:
        # v5e / v6e (and other 128 MiB parts): push bigger tiles.
        budget, vmem_limit = 32 * 1024 * 1024, 64 * 1024 * 1024
    multicore = any(t in kind for t in ("v4", "v5p", "v7"))

    Pt = _choose_tile_pixels(N, C, P, pred_flat.dtype.itemsize,
                             tgt_flat.dtype.itemsize, budget)
    num_tiles = pl.cdiv(P, Pt)
    G = 2 if (multicore and num_tiles >= 2) else 1   # one pixel chunk per core
    K = pl.cdiv(num_tiles, G)             # reduction steps per chunk
    P_pad = G * K * Pt
    if P_pad != P:                        # pad pixel axis up to the tile grid
        pred_flat = jnp.pad(pred_flat, ((0, 0), (0, 0), (0, P_pad - P)))
        tgt_flat = jnp.pad(tgt_flat, ((0, 0), (0, 0), (0, P_pad - P)))

    part = jax.ShapeDtypeStruct((G, N, C), jnp.float32)
    cost = pl.CostEstimate(
        flops=10 * N * C * P_pad,
        transcendentals=N * C * P_pad + N * P_pad,
        bytes_accessed=(pred_flat.size * pred_flat.dtype.itemsize
                        + tgt_flat.size * tgt_flat.dtype.itemsize
                        + 3 * G * N * C * 4))

    inter_p, ssm_p, soh_p = pl.pallas_call(
        _dice_partial_kernel,
        out_shape=(part, part, part),
        grid_spec=pltpu.PrefetchScalarGridSpec(
            num_scalar_prefetch=0,
            grid=(G, K),
            in_specs=[
                pl.BlockSpec((N, C, Pt), lambda g, k: (0, 0, g * K + k)),
                pl.BlockSpec((N, 1, Pt), lambda g, k: (0, 0, g * K + k)),
            ],
            out_specs=[
                pl.BlockSpec((1, N, C), lambda g, k: (g, 0, 0)),
                pl.BlockSpec((1, N, C), lambda g, k: (g, 0, 0)),
                pl.BlockSpec((1, N, C), lambda g, k: (g, 0, 0)),
            ],
        ),
        compiler_params=pltpu.CompilerParams(
            dimension_semantics=("parallel", "arbitrary"),
            vmem_limit_bytes=vmem_limit),
        cost_estimate=cost,
    )(pred_flat, tgt_flat)

    # Tiny epilogue in plain JAX (negligible; keeps the G grid axis parallel).
    intersection = jnp.sum(inter_p, axis=0)               # (N, C)
    sum_softmax = jnp.sum(ssm_p, axis=0)                  # (N, C)
    sum_onehot = jnp.sum(soh_p, axis=0)                   # (N, C)
    if P_pad != P:
        # Padded pred columns are all-zero -> uniform softmax 1/C per class;
        # padded target 0 never matches a class, so only ssm needs correcting.
        sum_softmax = sum_softmax - (P_pad - P) / C
    union = sum_softmax + sum_onehot
    dice_score = (2.0 * intersection + smooth) / (union + smooth)
    return 1.0 - jnp.mean(dice_score)


def _dice_loss_ref(pred, target, smooth=1.0):
    """Pure-JAX reference matching the PyTorch module."""
    N, C, H, W = pred.shape
    t = target - 1
    sm = jax.nn.softmax(pred.astype(jnp.float32), axis=1)
    onehot = jax.nn.one_hot(t, C, dtype=jnp.float32)                # (N,H,W,C)
    onehot = jnp.transpose(onehot, (0, 3, 1, 2))                    # (N,C,H,W)
    inter = jnp.sum(sm * onehot, axis=(2, 3))
    union = jnp.sum(sm, axis=(2, 3)) + jnp.sum(onehot, axis=(2, 3))
    dice = (2.0 * inter + smooth) / (union + smooth)
    return 1.0 - jnp.mean(dice)


if __name__ == "__main__":
    key = jax.random.PRNGKey(0)
    k_pred, k_tgt, k_pred2, k_tgt2 = jax.random.split(key, 4)

    # Case 1: original small shape, f32 pred, pixel count already lane-aligned.
    N, C, H, W = 2, 4, 16, 16
    pred = jax.random.normal(k_pred, (N, C, H, W), dtype=jnp.float32)
    target = jax.random.randint(k_tgt, (N, H, W), minval=1, maxval=C + 1,
                                dtype=jnp.int32)
    loss = jax.block_until_ready(dice_loss(pred, target, smooth=1.0))
    ref = jax.block_until_ready(_dice_loss_ref(pred, target, smooth=1.0))
    assert jnp.allclose(loss, ref, atol=1e-5, rtol=1e-5), (loss, ref)

    # Case 2: bf16 pred (native-dtype HBM path) + non-128-multiple spatial
    # size, exercising the padded-pixel epilogue correction path.
    N2, C2, H2, W2 = 2, 4, 10, 10
    pred2 = jax.random.normal(k_pred2, (N2, C2, H2, W2),
                              dtype=jnp.float32).astype(jnp.bfloat16)
    target2 = jax.random.randint(k_tgt2, (N2, H2, W2), minval=1,
                                 maxval=C2 + 1, dtype=jnp.int32)
    loss2 = jax.block_until_ready(dice_loss(pred2, target2, smooth=1.0))
    ref2 = jax.block_until_ready(_dice_loss_ref(pred2, target2, smooth=1.0))
    assert jnp.allclose(loss2, ref2, atol=1e-4, rtol=1e-4), (loss2, ref2)

    print("KERNEL_OK")
</pallas_src>

<mosaic_0001>
module attributes {stable_mosaic.version = 11 : i64} {
  func.func @_dice_partial_kernel(%arg0: i32, %arg1: i32, %arg2: memref<2x4x256xf32, #tpu.memory_space<vmem>>, %arg3: memref<2x1x256xi32, #tpu.memory_space<vmem>>, %arg4: memref<1x2x4xf32, #tpu.memory_space<vmem>>, %arg5: memref<1x2x4xf32, #tpu.memory_space<vmem>>, %arg6: memref<1x2x4xf32, #tpu.memory_space<vmem>>) attributes {dimension_semantics = [#tpu.dimension_semantics<parallel>, #tpu.dimension_semantics<arbitrary>], iteration_bounds = array<i64: 1, 1>, scalar_prefetch = 0 : i64, scratch_operands = 0 : i64, tpu.core_type = #tpu.core_type<tc>, window_params = [{transform_indices = @transform_0, window_bounds = array<i64: 2, 4, 256>}, {transform_indices = @transform_1, window_bounds = array<i64: 2, 1, 256>}, {transform_indices = @transform_2, window_bounds = array<i64: 1, 2, 4>}, {transform_indices = @transform_3, window_bounds = array<i64: 1, 2, 4>}, {transform_indices = @transform_4, window_bounds = array<i64: 1, 2, 4>}]} {
    %c0_i32 = arith.constant 0 : i32
    %0 = arith.cmpi eq, %arg1, %c0_i32 : i32
    %1 = arith.extui %0 : i1 to i32
    %c0_i32_0 = arith.constant 0 : i32
    %2 = arith.cmpi ne, %1, %c0_i32_0 : i32
    scf.if %2 {
      %cst_29 = arith.constant 0.000000e+00 : f32
      %49 = vector.broadcast %cst_29 : f32 to vector<1x2x4xf32>
      %c0_30 = arith.constant 0 : index
      %c0_31 = arith.constant 0 : index
      %c0_32 = arith.constant 0 : index
      %50 = vector.load %arg4[%c0_30, %c0_31, %c0_32] : memref<1x2x4xf32, #tpu.memory_space<vmem>>, vector<1x2x4xf32>
      tpu.vector_store %arg4[%c0_30, %c0_31, %c0_32], %49 {strides = array<i32>} : memref<1x2x4xf32, #tpu.memory_space<vmem>>, vector<1x2x4xf32>,
      %cst_33 = arith.constant 0.000000e+00 : f32
      %51 = vector.broadcast %cst_33 : f32 to vector<1x2x4xf32>
      %c0_34 = arith.constant 0 : index
      %c0_35 = arith.constant 0 : index
      %c0_36 = arith.constant 0 : index
      %52 = vector.load %arg5[%c0_34, %c0_35, %c0_36] : memref<1x2x4xf32, #tpu.memory_space<vmem>>, vector<1x2x4xf32>
      tpu.vector_store %arg5[%c0_34, %c0_35, %c0_36], %51 {strides = array<i32>} : memref<1x2x4xf32, #tpu.memory_space<vmem>>, vector<1x2x4xf32>,
      %cst_37 = arith.constant 0.000000e+00 : f32
      %53 = vector.broadcast %cst_37 : f32 to vector<1x2x4xf32>
      %c0_38 = arith.constant 0 : index
      %c0_39 = arith.constant 0 : index
      %c0_40 = arith.constant 0 : index
      %54 = vector.load %arg6[%c0_38, %c0_39, %c0_40] : memref<1x2x4xf32, #tpu.memory_space<vmem>>, vector<1x2x4xf32>
      tpu.vector_store %arg6[%c0_38, %c0_39, %c0_40], %53 {strides = array<i32>} : memref<1x2x4xf32, #tpu.memory_space<vmem>>, vector<1x2x4xf32>,
    } else {
    }
    %c0 = arith.constant 0 : index
    %c0_1 = arith.constant 0 : index
    %c0_2 = arith.constant 0 : index
    %3 = vector.load %arg2[%c0, %c0_1, %c0_2] : memref<2x4x256xf32, #tpu.memory_space<vmem>>, vector<2x4x256xf32>
    %cst = arith.constant dense<0xFF800000> : vector<2x256xf32>
    %4 = vector.multi_reduction <maximumf>, %3, %cst [1] : vector<2x4x256xf32> to vector<2x256xf32>
    %5 = vector.shape_cast %4 : vector<2x256xf32> to vector<2x1x256xf32>
    %6 = vector.broadcast %5 : vector<2x1x256xf32> to vector<2x4x256xf32>
    %7 = arith.subf %3, %6 : vector<2x4x256xf32>
    %8 = math.exp %7 : vector<2x4x256xf32>
    %cst_3 = arith.constant dense<0.000000e+00> : vector<2x256xf32>
    %9 = vector.multi_reduction <add>, %8, %cst_3 [1] : vector<2x4x256xf32> to vector<2x256xf32>
    %10 = vector.shape_cast %9 : vector<2x256xf32> to vector<2x1x256xf32>
    %11 = tpu.reciprocal %10 {approx = true} : vector<2x1x256xf32> -> vector<2x1x256xf32>
    %12 = arith.mulf %10, %11 : vector<2x1x256xf32>
    %cst_4 = arith.constant 2.000000e+00 : f32
    %13 = vector.broadcast %cst_4 : f32 to vector<2x1x256xf32>
    %14 = arith.subf %13, %12 : vector<2x1x256xf32>
    %15 = arith.mulf %11, %14 : vector<2x1x256xf32>
    %16 = vector.broadcast %15 : vector<2x1x256xf32> to vector<2x4x256xf32>
    %17 = arith.mulf %8, %16 : vector<2x4x256xf32>
    %c0_5 = arith.constant 0 : index
    %c0_6 = arith.constant 0 : index
    %c0_7 = arith.constant 0 : index
    %18 = vector.load %arg3[%c0_5, %c0_6, %c0_7] : memref<2x1x256xi32, #tpu.memory_space<vmem>>, vector<2x1x256xi32>
    %c1_i32 = arith.constant 1 : i32
    %19 = vector.broadcast %c1_i32 : i32 to vector<2x1x256xi32>
    %20 = arith.subi %18, %19 : vector<2x1x256xi32>
    %21 = tpu.iota {dimensions = array<i32: 1>} : vector<1x4x1xi32>
    %22 = vector.broadcast %21 : vector<1x4x1xi32> to vector<2x4x256xi32>
    %23 = vector.broadcast %20 : vector<2x1x256xi32> to vector<2x4x256xi32>
    %24 = arith.cmpi eq, %22, %23 : vector<2x4x256xi32>
    %25 = arith.extui %24 : vector<2x4x256xi1> to vector<2x4x256xi32>
    %26 = arith.sitofp %25 : vector<2x4x256xi32> to vector<2x4x256xf32>
    %c0_8 = arith.constant 0 : index
    %c0_9 = arith.constant 0 : index
    %c0_10 = arith.constant 0 : index
    %27 = vector.load %arg4[%c0_8, %c0_9, %c0_10] : memref<1x2x4xf32, #tpu.memory_space<vmem>>, vector<1x2x4xf32>
    %28 = vector.shape_cast %27 : vector<1x2x4xf32> to vector<2x4xf32>
    %29 = arith.mulf %26, %17 : vector<2x4x256xf32>
    %cst_11 = arith.constant dense<0.000000e+00> : vector<2x4xf32>
    %30 = vector.multi_reduction <add>, %29, %cst_11 [2] : vector<2x4x256xf32> to vector<2x4xf32>
    %31 = arith.addf %28, %30 : vector<2x4xf32>
    %c0_12 = arith.constant 0 : index
    %c0_13 = arith.constant 0 : index
    %c0_14 = arith.constant 0 : index
    %32 = vector.load %arg4[%c0_12, %c0_13, %c0_14] : memref<1x2x4xf32, #tpu.memory_space<vmem>>, vector<1x2x4xf32>
    %33 = vector.shape_cast %32 : vector<1x2x4xf32> to vector<2x4xf32>
    %34 = vector.shape_cast %31 : vector<2x4xf32> to vector<1x2x4xf32>
    tpu.vector_store %arg4[%c0_12, %c0_13, %c0_14], %34 {strides = array<i32>} : memref<1x2x4xf32, #tpu.memory_space<vmem>>, vector<1x2x4xf32>,
    %c0_15 = arith.constant 0 : index
    %c0_16 = arith.constant 0 : index
    %c0_17 = arith.constant 0 : index
    %35 = vector.load %arg5[%c0_15, %c0_16, %c0_17] : memref<1x2x4xf32, #tpu.memory_space<vmem>>, vector<1x2x4xf32>
    %36 = vector.shape_cast %35 : vector<1x2x4xf32> to vector<2x4xf32>
    %cst_18 = arith.constant dense<0.000000e+00> : vector<2x4xf32>
    %37 = vector.multi_reduction <add>, %17, %cst_18 [2] : vector<2x4x256xf32> to vector<2x4xf32>
    %38 = arith.addf %36, %37 : vector<2x4xf32>
    %c0_19 = arith.constant 0 : index
    %c0_20 = arith.constant 0 : index
    %c0_21 = arith.constant 0 : index
    %39 = vector.load %arg5[%c0_19, %c0_20, %c0_21] : memref<1x2x4xf32, #tpu.memory_space<vmem>>, vector<1x2x4xf32>
    %40 = vector.shape_cast %39 : vector<1x2x4xf32> to vector<2x4xf32>
    %41 = vector.shape_cast %38 : vector<2x4xf32> to vector<1x2x4xf32>
    tpu.vector_store %arg5[%c0_19, %c0_20, %c0_21], %41 {strides = array<i32>} : memref<1x2x4xf32, #tpu.memory_space<vmem>>, vector<1x2x4xf32>,
    %c0_22 = arith.constant 0 : index
    %c0_23 = arith.constant 0 : index
    %c0_24 = arith.constant 0 : index
    %42 = vector.load %arg6[%c0_22, %c0_23, %c0_24] : memref<1x2x4xf32, #tpu.memory_space<vmem>>, vector<1x2x4xf32>
    %43 = vector.shape_cast %42 : vector<1x2x4xf32> to vector<2x4xf32>
    %cst_25 = arith.constant dense<0.000000e+00> : vector<2x4xf32>
    %44 = vector.multi_reduction <add>, %26, %cst_25 [2] : vector<2x4x256xf32> to vector<2x4xf32>
    %45 = arith.addf %43, %44 : vector<2x4xf32>
    %c0_26 = arith.constant 0 : index
    %c0_27 = arith.constant 0 : index
    %c0_28 = arith.constant 0 : index
    %46 = vector.load %arg6[%c0_26, %c0_27, %c0_28] : memref<1x2x4xf32, #tpu.memory_space<vmem>>, vector<1x2x4xf32>
    %47 = vector.shape_cast %46 : vector<1x2x4xf32> to vector<2x4xf32>
    %48 = vector.shape_cast %45 : vector<2x4xf32> to vector<1x2x4xf32>
    tpu.vector_store %arg6[%c0_26, %c0_27, %c0_28], %48 {strides = array<i32>} : memref<1x2x4xf32, #tpu.memory_space<vmem>>, vector<1x2x4xf32>,
    return
  }
  func.func @transform_0(%arg0: i32, %arg1: i32) -> (i32, i32, i32) {
    %c1_i32 = arith.constant 1 : i32
    %0 = arith.muli %arg0, %c1_i32 : i32
    %1 = arith.addi %0, %arg1 : i32
    %c0_i32 = arith.constant 0 : i32
    %c0_i32_0 = arith.constant 0 : i32
    %c0_i32_1 = arith.constant 0 : i32
    return %c0_i32, %c0_i32_0, %1 : i32, i32, i32
  }
  func.func @transform_1(%arg0: i32, %arg1: i32) -> (i32, i32, i32) {
    %c1_i32 = arith.constant 1 : i32
    %0 = arith.muli %arg0, %c1_i32 : i32
    %1 = arith.addi %0, %arg1 : i32
    %c0_i32 = arith.constant 0 : i32
    %c0_i32_0 = arith.constant 0 : i32
    %c0_i32_1 = arith.constant 0 : i32
    return %c0_i32, %c0_i32_0, %1 : i32, i32, i32
  }
  func.func @transform_2(%arg0: i32, %arg1: i32) -> (i32, i32, i32) {
    %c0_i32 = arith.constant 0 : i32
    %c0_i32_0 = arith.constant 0 : i32
    %c0_i32_1 = arith.constant 0 : i32
    return %arg0, %c0_i32, %c0_i32_0 : i32, i32, i32
  }
  func.func @transform_3(%arg0: i32, %arg1: i32) -> (i32, i32, i32) {
    %c0_i32 = arith.constant 0 : i32
    %c0_i32_0 = arith.constant 0 : i32
    %c0_i32_1 = arith.constant 0 : i32
    return %arg0, %c0_i32, %c0_i32_0 : i32, i32, i32
  }
  func.func @transform_4(%arg0: i32, %arg1: i32) -> (i32, i32, i32) {
    %c0_i32 = arith.constant 0 : i32
    %c0_i32_0 = arith.constant 0 : i32
    %c0_i32_1 = arith.constant 0 : i32
    return %arg0, %c0_i32, %c0_i32_0 : i32, i32, i32
  }
}

</mosaic_0001>

<llo_original>
// kernel: tpu_custom_call.1
$region0: #{tpu_custom_call.1}
  #allocation0 [shape = 'u32[]', space=smem, size = 0x4, offset = 0x4, fixed_abs, tag = 'smem constant byte address 0x4 - core index']
  #allocation1 [shape = 'u32[144,128]{1,0:T(1,128)}', space=vmem, size = 0x12000, scoped, tag = 'internal scratch']
  %s0 = inlined_call_operand.hbm [shape: f32[2,4,256], index: 0, kind: input, shape index: {}]
  %s1 = inlined_call_operand.hbm [shape: s32[2,1,256], index: 1, kind: input, shape index: {}]
  %s2 = inlined_call_operand.hbm [shape: f32[1,2,4], index: 2, kind: output, shape index: {0}]
  %s3 = inlined_call_operand.hbm [shape: f32[1,2,4], index: 3, kind: output, shape index: {1}]
  %s4 = inlined_call_operand.hbm [shape: f32[1,2,4], index: 4, kind: output, shape index: {2}]
  %5 = xla_tuple %s2, %s3, %s4
  %s6 = sld [smem:[#allocation0]]
  $region46: #{tpu_custom_call.1} parent=0
    _
  %s8 = ssub.s32 1, %s6
  %s9 = scalar_select 0, %s8, %s6
  $region1: #{tpu_custom_call.1} parent=0
    #allocation2 [shape = 'u8[8192]{0}', space=vmem, size = 0x2000, scoped, tag = 'input window, operand 0, single buffered']
    #allocation3 [shape = 's32[1]{0}', space=sflag, size = 0x4, scoped, tag = 'scoped memory for tpu_custom_call.1']
    #allocation4 [shape = 's32[1]{0}', space=sflag, size = 0x4, scoped, tag = 'scoped memory for tpu_custom_call.1']
    #allocation5 [shape = 'u8[2048]{0}', space=vmem, size = 0x800, scoped, tag = 'input window, operand 1, single buffered']
    #allocation6 [shape = 's32[1]{0}', space=sflag, size = 0x4, scoped, tag = 'scoped memory for tpu_custom_call.1']
    #allocation7 [shape = 'u8[1024]{0}', space=vmem, size = 0x400, scoped, tag = 'output window, operand 0, single buffered']
    #allocation8 [shape = 'u8[1024]{0}', space=vmem, size = 0x400, scoped, tag = 'output window, operand 1, single buffered']
    #allocation9 [shape = 's32[1]{0}', space=sflag, size = 0x4, scoped, tag = 'scoped memory for tpu_custom_call.1']
    #allocation10 [shape = 'u8[1024]{0}', space=vmem, size = 0x400, scoped, tag = 'output window, operand 2, single buffered']
    %10 = vsyncpa [#allocation3], 0
    %11 = vsyncpa [#allocation6], 0
    %12 = vsyncpa [#allocation4], 0
    %13 = vsyncpa [#allocation9], 0
    // Predicated region
    $region2: #{tpu_custom_call.1} parent=1 // pred_check
      _
    $region3: #{tpu_custom_call.1} parent=1 // pred_check_branch
      %15 = sbr.rel (0) target = $region5
    $region4: #{tpu_custom_call.1} parent=1 // pred_region
      %s16 = sadd.s32 0, 0
      %s17 = smul.u32 2, %s16
      %s19 = ssub.s32 256, 256
      %20 = vsyncadd [#allocation3], %s19
      %s21 = smul.addr %s17, 64
      %s22 = scalar_lea.hbm %s0, %s21
      %s23 = sshll.u32 [#allocation2], 4
      %s24 = int_to_ptr.vmem [resolvable:$true] %s23
      %29 = dma.hbm_to_vmem [thread:$0]  %s22, 256, %s24, [#allocation3], 128, 128, 8
    $region5: #{tpu_custom_call.1} parent=1 // pred_fallthru
      _
    // Predicated region
    $region6: #{tpu_custom_call.1} parent=1 // pred_check
      _
    $region7: #{tpu_custom_call.1} parent=1 // pred_check_branch
      %31 = sbr.rel (0) target = $region9
    $region8: #{tpu_custom_call.1} parent=1 // pred_region
      %s32 = sadd.s32 0, 0
      %s33 = smul.u32 2, %s32
      %s35 = ssub.s32 64, 64
      %36 = vsyncadd [#allocation6], %s35
      %s37 = smul.addr %s33, 16
      %s38 = scalar_lea.hbm %s1, %s37
      %s39 = sshll.u32 [#allocation5], 4
      %s40 = int_to_ptr.vmem [resolvable:$true] %s39
      %45 = dma.hbm_to_vmem [thread:$0]  %s38, 64, %s40, [#allocation6], 32, 32, 2
    $region9: #{tpu_custom_call.1} parent=1 // pred_fallthru
      _
    // Predicated region
    $region10: #{tpu_custom_call.1} parent=1 // pred_check
      _
    $region11: #{tpu_custom_call.1} parent=1 // pred_check_branch
      %47 = sbr.rel (0) target = $region13
    $region12: #{tpu_custom_call.1} parent=1 // pred_region
      %48 = dma.done [#allocation3], 256
    $region13: #{tpu_custom_call.1} parent=1 // pred_fallthru
      _
    // Predicated region
    $region14: #{tpu_custom_call.1} parent=1 // pred_check
      _
    $region15: #{tpu_custom_call.1} parent=1 // pred_check_branch
      %50 = sbr.rel (0) target = $region17
    $region16: #{tpu_custom_call.1} parent=1 // pred_region
      %51 = dma.done [#allocation6], 64
    $region17: #{tpu_custom_call.1} parent=1 // pred_fallthru
      _
    %s52 = sadd.s32 0, 0
    %s53 = smul.u32 2, %s52
    %s54 = sadd.s32 0, 0
    %s55 = smul.u32 2, %s54
    %p56 = scmp.eq.s32.totalorder 0, 0
    // Predicated region
    $region18: #{tpu_custom_call.1} parent=1 // pred_check
      %p57 = pneg %p56
    $region19: #{tpu_custom_call.1} parent=1 // pred_check_branch
      %59 = sbr.rel (%p57) target = $region21
    $region20: #{tpu_custom_call.1} parent=1 // pred_region
      %vm60 = vcmask 25600
      %61 = vst.msk [vmem:[#allocation7] sm:$0x3] %vm60, 0.0
      %62 = vst.msk [vmem:[#allocation8] sm:$0x3] %vm60, 0.0
      %63 = vst.msk [vmem:[#allocation10] sm:$0x3] %vm60, 0.0
    $region21: #{tpu_custom_call.1} parent=1 // pred_fallthru
      _
    %v64 = vld [vmem:[#allocation2] sm:$0xff]
    %v65 = vld [vmem:[#allocation2 + $0x8] sm:$0xff]
    %v68 = vcombine.high %v64, %v64
    %v69 = vcombine.high %v65, %v65
    %vm72 = vcmask 1043456
    %v73 = vsel %vm72, %v64, -inf
    %v74 = vrot.slane %v73, 4
    %v75 = vmax.f32 %v73, %v74
    %v76 = vrot.slane %v75, 2
    %v77 = vmax.f32 %v75, %v76
    %v78 = vrot.slane %v77, 1
    %v79 = vmax.f32 %v77, %v78
    %v80 = vsel %vm72, %v68, -inf
    %v81 = vrot.slane %v80, 4
    %v82 = vmax.f32 %v80, %v81
    %v83 = vrot.slane %v82, 2
    %v84 = vmax.f32 %v82, %v83
    %v85 = vrot.slane %v84, 1
    %v86 = vmax.f32 %v84, %v85
    %v87 = vsel %vm72, %v65, -inf
    %v88 = vrot.slane %v87, 4
    %v89 = vmax.f32 %v87, %v88
    %v90 = vrot.slane %v89, 2
    %v91 = vmax.f32 %v89, %v90
    %v92 = vrot.slane %v91, 1
    %v93 = vmax.f32 %v91, %v92
    %v94 = vsel %vm72, %v69, -inf
    %v95 = vrot.slane %v94, 4
    %v96 = vmax.f32 %v94, %v95
    %v97 = vrot.slane %v96, 2
    %v98 = vmax.f32 %v96, %v97
    %v99 = vrot.slane %v98, 1
    %v100 = vmax.f32 %v98, %v99
    %v105 = vcombine.low %v79, %v86
    %v106 = vcombine.low %v93, %v100
    %v109 = vsub.f32 %v64, %v105
    %v110 = vsub.f32 %v65, %v106
    %v111 = vmul.f32 %v109, 1.442695
    %v112 = vpow.pop %v111
    %v113 = vmul.f32 %v110, 1.442695
    %v114 = vpow.pop %v113
    %v117 = vcombine.high %v112, %v112
    %v118 = vcombine.high %v114, %v114
    %v121 = vsel %vm72, %v112, 0.0
    %v122 = vrot.slane %v121, 4
    %v123 = vadd.f32 %v121, %v122
    %v124 = vrot.slane %v123, 2
    %v125 = vadd.f32 %v123, %v124
    %v126 = vrot.slane %v125, 1
    %v127 = vadd.f32 %v125, %v126
    %v128 = vsel %vm72, %v117, 0.0
    %v129 = vrot.slane %v128, 4
    %v130 = vadd.f32 %v128, %v129
    %v131 = vrot.slane %v130, 2
    %v132 = vadd.f32 %v130, %v131
    %v133 = vrot.slane %v132, 1
    %v134 = vadd.f32 %v132, %v133
    %v135 = vsel %vm72, %v114, 0.0
    %v136 = vrot.slane %v135, 4
    %v137 = vadd.f32 %v135, %v136
    %v138 = vrot.slane %v137, 2
    %v139 = vadd.f32 %v137, %v138
    %v140 = vrot.slane %v139, 1
    %v141 = vadd.f32 %v139, %v140
    %v142 = vsel %vm72, %v118, 0.0
    %v143 = vrot.slane %v142, 4
    %v144 = vadd.f32 %v142, %v143
    %v145 = vrot.slane %v144, 2
    %v146 = vadd.f32 %v144, %v145
    %v147 = vrot.slane %v146, 1
    %v148 = vadd.f32 %v146, %v147
    %v149 = vrcp.pop %v127
    %v150 = vrcp.pop %v134
    %v151 = vrcp.pop %v141
    %v152 = vrcp.pop %v148
    %v153 = vmul.f32 %v127, %v149
    %v154 = vmul.f32 %v134, %v150
    %v155 = vmul.f32 %v141, %v151
    %v156 = vmul.f32 %v148, %v152
    %v157 = vsub.f32 2.0, %v153
    %v158 = vsub.f32 2.0, %v154
    %v159 = vsub.f32 2.0, %v155
    %v160 = vsub.f32 2.0, %v156
    %v161 = vmul.f32 %v149, %v157
    %v162 = vmul.f32 %v150, %v158
    %v163 = vmul.f32 %v151, %v159
    %v164 = vmul.f32 %v152, %v160
    %v169 = vcombine.low %v161, %v162
    %v170 = vcombine.low %v163, %v164
    %v173 = vmul.f32 %v112, %v169
    %v174 = vmul.f32 %v114, %v170
    %v175 = vld [vmem:[#allocation5] sm:$0x3]
    %v176 = vld [vmem:[#allocation5 + $0x2] sm:$0x3]
    %v177 = vsub.s32 %v175, 1
    %v178 = vsub.s32 %v176, 1
    %v179 = vlaneseq
    %v180 = vshrl.u32 %v179, 7
    %v181 = vlaneseq
    %v182 = vshrl.u32 %v181, 7
    %v183 = vsub.s32 0, %v182
    %v184 = vrot.slane %v177, %v183
    %v185 = vlaneseq
    %v186 = vshrl.u32 %v185, 7
    %v187 = vsub.s32 1, %v186
    %v188 = vrot.slane %v177, %v187
    %v189 = vlaneseq
    %v190 = vshrl.u32 %v189, 7
    %v191 = vsub.s32 0, %v190
    %v192 = vrot.slane %v178, %v191
    %v193 = vlaneseq
    %v194 = vshrl.u32 %v193, 7
    %v195 = vsub.s32 1, %v194
    %v196 = vrot.slane %v178, %v195
    %vm197 = vcmp.eq.s32.totalorder %v180, %v184
    %vm198 = vcmp.eq.s32.totalorder %v180, %v188
    %vm199 = vcmp.eq.s32.totalorder %v180, %v192
    %vm200 = vcmp.eq.s32.totalorder %v180, %v196
    %v201 = vsel %vm197, 1, 0
    %v202 = vsel %vm198, 1, 0
    %v203 = vsel %vm199, 1, 0
    %v204 = vsel %vm200, 1, 0
    %v205 = vcvt.s32.f32 %v201
    %v206 = vcvt.s32.f32 %v202
    %v207 = vcvt.s32.f32 %v203
    %v208 = vcvt.s32.f32 %v204
    %v209 = vld [vmem:[#allocation7] sm:$0x3]
    %v212 = vcombine.high %v173, %v173
    %v213 = vcombine.high %v174, %v174
    %v216 = vmul.f32 %v205, %v173
    %v217 = vmul.f32 %v206, %v212
    %v218 = vmul.f32 %v207, %v174
    %v219 = vmul.f32 %v208, %v213
    %v220 = vsel %vm72, %v216, 0.0
    %v221 = vsel %vm72, %v217, 0.0
    %v222 = vadd.f32 %v220, %v221
    %223 = vadd.xlane.f32.xlu0 %v222
    %v224 = vpop.xlane.xlu0 %223
    %v225 = vsel %vm72, %v218, 0.0
    %v226 = vsel %vm72, %v219, 0.0
    %v227 = vadd.f32 %v225, %v226
    %228 = vadd.xlane.f32.xlu0 %v227
    %v229 = vpop.xlane.xlu0 %228
    %v232 = vlaneseq
    %v233 = vand.u32 %v232, 127
    %v234 = vlaneseq
    %v235 = vshrl.u32 %v234, 7
    %v236 = vsub.s32 %v233, %v235
    %v237 = vrot.slane %v224, %v236
    %v238 = vlaneseq
    %v239 = vshrl.u32 %v238, 7
    %v240 = vsub.s32 %v233, %v239
    %v241 = vrot.slane %v229, %v240
    %vm242 = vcmask 1041409
    %v243 = vsel %vm242, %v241, %v237
    %v245 = vadd.f32 %v209, %v243
    %vm246 = vcmask 25600
    %247 = vst.msk [vmem:[#allocation7] sm:$0x3] %vm246, %v245
    %v248 = vld [vmem:[#allocation8] sm:$0x3]
    %v249 = vsel %vm72, %v173, 0.0
    %v250 = vsel %vm72, %v212, 0.0
    %v251 = vadd.f32 %v249, %v250
    %252 = vadd.xlane.f32.xlu0 %v251
    %v253 = vpop.xlane.xlu0 %252
    %v254 = vsel %vm72, %v174, 0.0
    %v255 = vsel %vm72, %v213, 0.0
    %v256 = vadd.f32 %v254, %v255
    %257 = vadd.xlane.f32.xlu0 %v256
    %v258 = vpop.xlane.xlu0 %257
    %v261 = vlaneseq
    %v262 = vshrl.u32 %v261, 7
    %v263 = vsub.s32 %v233, %v262
    %v264 = vrot.slane %v253, %v263
    %v265 = vlaneseq
    %v266 = vshrl.u32 %v265, 7
    %v267 = vsub.s32 %v233, %v266
    %v268 = vrot.slane %v258, %v267
    %v269 = vsel %vm242, %v268, %v264
    %v271 = vadd.f32 %v248, %v269
    %272 = vst.msk [vmem:[#allocation8] sm:$0x3] %vm246, %v271
    %v273 = vld [vmem:[#allocation10] sm:$0x3]
    %v274 = vsel %vm72, %v205, 0.0
    %v275 = vsel %vm72, %v206, 0.0
    %v276 = vadd.f32 %v274, %v275
    %277 = vadd.xlane.f32.xlu0 %v276
    %v278 = vpop.xlane.xlu0 %277
    %v279 = vsel %vm72, %v207, 0.0
    %v280 = vsel %vm72, %v208, 0.0
    %v281 = vadd.f32 %v279, %v280
    %282 = vadd.xlane.f32.xlu0 %v281
    %v283 = vpop.xlane.xlu0 %282
    %v286 = vlaneseq
    %v287 = vshrl.u32 %v286, 7
    %v288 = vsub.s32 %v233, %v287
    %v289 = vrot.slane %v278, %v288
    %v290 = vlaneseq
    %v291 = vshrl.u32 %v290, 7
    %v292 = vsub.s32 %v233, %v291
    %v293 = vrot.slane %v283, %v292
    %v294 = vsel %vm242, %v293, %v289
    %v296 = vadd.f32 %v273, %v294
    %297 = vst.msk [vmem:[#allocation10] sm:$0x3] %vm246, %v296
    // Predicated region
    $region22: #{tpu_custom_call.1} parent=1 // pred_check
      _
    $region23: #{tpu_custom_call.1} parent=1 // pred_check_branch
      %299 = sbr.rel (0) target = $region25
    $region24: #{tpu_custom_call.1} parent=1 // pred_region
      %s301 = ssub.s32 32, 32
      %302 = vsyncadd [#allocation4], %s301
      %s304 = sshll.u32 [#allocation7], 4
      %s305 = int_to_ptr.vmem [resolvable:$true] %s304
      %307 = dma.vmem_to_hbm [thread:$0]  %s305, 32, %s2, [#allocation4]
    $region25: #{tpu_custom_call.1} parent=1 // pred_fallthru
      _
    // Predicated region
    $region26: #{tpu_custom_call.1} parent=1 // pred_check
      _
    $region27: #{tpu_custom_call.1} parent=1 // pred_check_branch
      %309 = sbr.rel (0) target = $region29
    $region28: #{tpu_custom_call.1} parent=1 // pred_region
      %s311 = ssub.s32 32, 32
      %312 = vsyncadd [#allocation9], %s311
      %s314 = sshll.u32 [#allocation8], 4
      %s315 = int_to_ptr.vmem [resolvable:$true] %s314
      %317 = dma.vmem_to_hbm [thread:$0]  %s315, 32, %s3, [#allocation9]
    $region29: #{tpu_custom_call.1} parent=1 // pred_fallthru
      _
    // Predicated region
    $region30: #{tpu_custom_call.1} parent=1 // pred_check
      _
    $region31: #{tpu_custom_call.1} parent=1 // pred_check_branch
      %319 = sbr.rel (0) target = $region33
    $region32: #{tpu_custom_call.1} parent=1 // pred_region
      %s321 = ssub.s32 32, 32
      %322 = vsyncadd [#allocation9], %s321
      %s324 = sshll.u32 [#allocation10], 4
      %s325 = int_to_ptr.vmem [resolvable:$true] %s324
      %327 = dma.vmem_to_hbm [thread:$0]  %s325, 32, %s4, [#allocation9]
    $region33: #{tpu_custom_call.1} parent=1 // pred_fallthru
      _
    // Predicated region
    $region34: #{tpu_custom_call.1} parent=1 // pred_check
      _
    $region35: #{tpu_custom_call.1} parent=1 // pred_check_branch
      %329 = sbr.rel (0) target = $region37
    $region36: #{tpu_custom_call.1} parent=1 // pred_region
      %330 = dma.done [#allocation4], 32
    $region37: #{tpu_custom_call.1} parent=1 // pred_fallthru
      _
    // Predicated region
    $region38: #{tpu_custom_call.1} parent=1 // pred_check
      _
    $region39: #{tpu_custom_call.1} parent=1 // pred_check_branch
      %332 = sbr.rel (0) target = $region41
    $region40: #{tpu_custom_call.1} parent=1 // pred_region
      %333 = dma.done [#allocation9], 32
    $region41: #{tpu_custom_call.1} parent=1 // pred_fallthru
      _
    // Predicated region
    $region42: #{tpu_custom_call.1} parent=1 // pred_check
      _
    $region43: #{tpu_custom_call.1} parent=1 // pred_check_branch
      %335 = sbr.rel (0) target = $region45
    $region44: #{tpu_custom_call.1} parent=1 // pred_region
      %336 = dma.done [#allocation9], 32
    $region45: #{tpu_custom_call.1} parent=1 // pred_fallthru
      _
    %337 = vsyncpa [#allocation3], 1
    %338 = vsyncpa [#allocation6], 1
    %339 = vsyncpa [#allocation4], 1
    %340 = vsyncpa [#allocation9], 1

</llo_original>
